<compile_context>
chip_gen: v7x
topology: tpu7x:2x2x1
jax: 0.10.0
libtpu: 0.0.40
codegen_flags: <defaults>
</compile_context>

<pallas_src>
import functools

import jax
import jax.numpy as jnp
from jax.experimental import pallas as pl
from jax.experimental.pallas import tpu as pltpu


_SCAN_TILE_ROWS = 4096       # (4096,128) f32 = 2 MiB per scan tile
_APPLY_TILE_ROWS = 2048      # target TB*trw rows per apply tile (~1 MiB f32)
_FUSED_VMEM_BUDGET = 28 << 20  # fused single-launch path budget (all generations)


def _clamp_vmem(estimate_bytes):
    """Explicit scoped-VMEM limit: generous headroom, but well under v7x's
    64 MiB physical VMEM (v5e/v6e have 128 MiB physical)."""
    return int(min(max(2 * estimate_bytes, 20 << 20), 40 << 20))


# ----------------------------------------------------------------------------
# Kernel 1 (large-x path): global min/max over a (rows, 128) slab.
# Grid = (ncores, inner): leading "parallel" axis splits the HBM scan across
# TensorCores (v7x); inner "arbitrary" axis streams row-tiles.  Each tile is
# reduced in registers (VALU tree over groups of 8 rows) and folded into the
# (8,128) output block, which stays VMEM-resident across the inner axis.
# ----------------------------------------------------------------------------
def _minmax_kernel(x_ref, min_ref, max_ref, *, tr, rows, inner, need_mask):
    i = pl.program_id(1)

    @pl.when(i == 0)
    def _():
        min_ref[...] = jnp.full(min_ref.shape, jnp.inf, jnp.float32)
        max_ref[...] = jnp.full(max_ref.shape, -jnp.inf, jnp.float32)

    xt = x_ref[...].astype(jnp.float32)              # (tr, 128)
    if need_mask:
        # Tail / overflow blocks: neutralize rows past the real extent.
        blk = pl.program_id(0) * inner + i
        rid = blk * tr + jax.lax.broadcasted_iota(jnp.int32, (tr, 128), 0)
        valid = rid < rows
        x_lo = jnp.where(valid, xt, jnp.inf)
        x_hi = jnp.where(valid, xt, -jnp.inf)
    else:
        x_lo = xt
        x_hi = xt
    # In-register VALU tree: fold groups of 8 rows (one vreg each) into a
    # single (8,128) partial -> only 1 ld + 1 st on the accumulator per tile.
    p_lo = jnp.min(x_lo.reshape(tr // 8, 8, 128), axis=0)
    p_hi = jnp.max(x_hi.reshape(tr // 8, 8, 128), axis=0)
    min_ref[...] = jnp.minimum(min_ref[...], p_lo)
    max_ref[...] = jnp.maximum(max_ref[...], p_hi)


def _global_minmax(arr):
    """Global (min, max) of `arr` as f32 scalars (element count % 128 == 0)."""
    total = arr.size
    assert total % 128 == 0, "element count must be a multiple of 128"
    flat = arr.reshape(-1, 128)
    rows = flat.shape[0]
    if rows % 8 != 0:
        # TODO(synk): edge-padding costs one extra HBM copy; only hit when
        # B*C*H*W/128 is not sublane(8)-aligned.
        pad = (-rows) % 8
        flat = jnp.concatenate(
            [flat, jnp.broadcast_to(flat[-1:], (pad, 128))], axis=0)
        rows += pad

    tr = min(rows, _SCAN_TILE_ROWS)          # multiple of 8 by construction
    nblocks = pl.cdiv(rows, tr)
    ncores = 2 if nblocks >= 2 else 1        # v7x: split scan across both TCs
    inner = pl.cdiv(nblocks, ncores)
    need_mask = (ncores * inner * tr != rows)

    if ncores * inner == nblocks:
        x_map = lambda p, i: (p * inner + i, 0)
    else:
        # Odd block count: clamp overflow steps to the last real block; the
        # in-kernel mask makes their contribution a no-op.
        x_map = lambda p, i: (jnp.minimum(p * inner + i, nblocks - 1), 0)

    kern = functools.partial(
        _minmax_kernel, tr=tr, rows=rows, inner=inner, need_mask=need_mask)
    scan_est = 2 * tr * 128 * flat.dtype.itemsize + tr * 128 * 4 + (1 << 20)

    mins, maxs = pl.pallas_call(
        kern,
        out_shape=(
            jax.ShapeDtypeStruct((ncores * 8, 128), jnp.float32),
            jax.ShapeDtypeStruct((ncores * 8, 128), jnp.float32),
        ),
        grid_spec=pltpu.PrefetchScalarGridSpec(
            num_scalar_prefetch=0,
            grid=(ncores, inner),
            in_specs=[pl.BlockSpec((tr, 128), x_map)],
            out_specs=(
                pl.BlockSpec((8, 128), lambda p, i: (p, 0)),
                pl.BlockSpec((8, 128), lambda p, i: (p, 0)),
            ),
        ),
        compiler_params=pltpu.CompilerParams(
            dimension_semantics=("parallel", "arbitrary"),
            vmem_limit_bytes=_clamp_vmem(scan_est),
        ),
    )(flat)
    # Tiny (8..16, 128) partials; final fold in plain XLA.
    return jnp.min(mins), jnp.max(maxs)


# ----------------------------------------------------------------------------
# Kernel 2 (large-x path): fused elementwise apply.
#   out = relu((x - x_min) * inv_range) * w_norm
# x_min / inv_range are SMEM scalars; w_norm is precomputed (hoisted) and
# broadcast over the batch-block inside the kernel.  Strictly HBM-bound:
# only tile size / batch-blocking / core sharding matter here.
# ----------------------------------------------------------------------------
def _vhn_apply_kernel(scal_ref, x_ref, wn_ref, o_ref):
    x_min = scal_ref[0]
    inv_rng = scal_ref[1]
    nx = jnp.maximum((x_ref[...].astype(jnp.float32) - x_min) * inv_rng, 0.0)
    o_ref[...] = (nx * wn_ref[...]).astype(o_ref.dtype)   # wn broadcasts over TB


# ----------------------------------------------------------------------------
# Kernel 3 (small-x path): everything fused in one launch — x and w stay
# resident in VMEM; min/max, both normalizations, relus and the multiply all
# happen in a single kernel invocation (3 HBM passes -> 2).
# ----------------------------------------------------------------------------
def _vhn_fused_kernel(x_ref, w_ref, o_ref):
    x = x_ref[...].astype(jnp.float32)
    w = w_ref[...].astype(jnp.float32)
    x_min = jnp.min(x)
    x_max = jnp.max(x)
    w_min = jnp.min(w)
    w_max = jnp.max(w)
    nx = jnp.maximum((x - x_min) * (1.0 / (x_max - x_min)), 0.0)
    nw = jnp.maximum((w - w_min + 1.0) * (1.0 / (w_max - w_min + 2.0)), 0.0)
    o_ref[...] = (nx * nw).astype(o_ref.dtype)   # (1,R,128) broadcasts over batch


@functools.partial(jax.jit, static_argnames=("force_two_pass",))
def vhn_forward(x, weights, *, force_two_pass=False):
    """VHNLayer.forward.  x: (B, C, H, W); weights: (C, H, W).
    Note: x_max == x_min yields inf/NaN, matching the torch reference's 1/0."""
    B, C, H, W = x.shape
    assert weights.shape == (C, H, W)
    N = C * H * W
    # TODO(synk): C*H*W not a multiple of 128 would need a padded/masked variant.
    assert N % 128 == 0, "C*H*W must be a multiple of 128 for this kernel"
    rows_w = N // 128
    out_dtype = jnp.promote_types(x.dtype, weights.dtype)
    x_item = jnp.dtype(x.dtype).itemsize
    o_item = jnp.dtype(out_dtype).itemsize

    x3 = x.reshape(B, rows_w, 128)        # lane-dense view; no host-side cast
    w3 = weights.reshape(1, rows_w, 128)

    # ---------------- small problem: one fully fused launch -----------------
    fused_est = (x.size * (x_item + o_item) + 2 * x.size * 4
                 + 3 * weights.size * 4 + (2 << 20))
    if (not force_two_pass) and fused_est <= _FUSED_VMEM_BUDGET:
        out3 = pl.pallas_call(
            _vhn_fused_kernel,
            out_shape=jax.ShapeDtypeStruct((B, rows_w, 128), out_dtype),
            grid_spec=pltpu.PrefetchScalarGridSpec(
                num_scalar_prefetch=0,
                grid=(1,),
                in_specs=[
                    pl.BlockSpec((B, rows_w, 128), lambda i: (0, 0, 0)),
                    pl.BlockSpec((1, rows_w, 128), lambda i: (0, 0, 0)),
                ],
                out_specs=pl.BlockSpec((B, rows_w, 128), lambda i: (0, 0, 0)),
            ),
            compiler_params=pltpu.CompilerParams(
                dimension_semantics=("arbitrary",),
                vmem_limit_bytes=int(min(fused_est + (4 << 20), 32 << 20)),
            ),
        )(x3, w3)
        return out3.reshape(B, C, H, W)

    # ---------------- large problem: exactly two launches --------------------
    # 1) Global min/max of x (wide-tile Pallas scan).
    x_min, x_max = _global_minmax(x)
    # Precompute the reciprocal so the hot loop multiplies instead of divides.
    scalars = jnp.stack([x_min, 1.0 / (x_max - x_min)]).astype(jnp.float32)

    # Weight-side work hoisted out of the hot loop (w is only C*H*W elements):
    # curly_Nprime + relu computed once in plain XLA.
    w_f32 = weights.astype(jnp.float32)
    w_min = jnp.min(w_f32)
    w_max = jnp.max(w_f32)
    w_norm = jnp.maximum((w_f32 - w_min + 1.0) / (w_max - w_min + 2.0), 0.0)
    wn3 = w_norm.reshape(1, rows_w, 128)

    # Tile: block over batch too when rows_w is small so each x/out tile is a
    # ~1 MiB lane-dense slab (per-step overhead amortized).
    if rows_w <= _APPLY_TILE_ROWS:
        trw = rows_w                              # full row dim (always legal)
        tb = min(B, max(1, _APPLY_TILE_ROWS // rows_w))
    else:
        trw = _APPLY_TILE_ROWS                    # multiple of 8
        tb = 1
    n_j = pl.cdiv(rows_w, trw)
    n_b = pl.cdiv(B, tb)

    apply_est = (2 * tb * trw * 128 * (x_item + o_item)   # x/out double-buffered
                 + 2 * trw * 128 * 4                       # w_norm tile
                 + 2 * tb * trw * 128 * 4                  # f32 temps
                 + (1 << 20))

    # 2) Fused elementwise apply.  Batch is the innermost grid axis so the
    #    w_norm tile index stays constant across it (reused, not re-fetched).
    #    Both axes "parallel" so v7x can shard over its two TensorCores.
    out3 = pl.pallas_call(
        _vhn_apply_kernel,
        out_shape=jax.ShapeDtypeStruct((B, rows_w, 128), out_dtype),
        grid_spec=pltpu.PrefetchScalarGridSpec(
            num_scalar_prefetch=0,
            grid=(n_j, n_b),
            in_specs=[
                pl.BlockSpec(memory_space=pltpu.MemorySpace.SMEM),     # [x_min, 1/range]
                pl.BlockSpec((tb, trw, 128), lambda j, b: (b, j, 0)),  # x tile
                pl.BlockSpec((1, trw, 128), lambda j, b: (0, j, 0)),   # w_norm tile
            ],
            out_specs=pl.BlockSpec((tb, trw, 128), lambda j, b: (b, j, 0)),
        ),
        compiler_params=pltpu.CompilerParams(
            dimension_semantics=("parallel", "parallel"),
            vmem_limit_bytes=_clamp_vmem(apply_est),
        ),
    )(scalars, x3, wn3)
    return out3.reshape(B, C, H, W)


def init_vhn_weights(key, channels, img_len, img_width):
    """Deterministic stand-in for nn.init.kaiming_uniform_(w, a=sqrt(5)).
    For a 3-D tensor torch uses fan_in = img_len * img_width, gain = sqrt(1/3),
    bound = gain * sqrt(3 / fan_in) = 1 / sqrt(fan_in)."""
    fan_in = img_len * img_width
    bound = 1.0 / jnp.sqrt(jnp.float32(fan_in))
    return jax.random.uniform(
        key, (channels, img_len, img_width), jnp.float32, -bound, bound
    )


if __name__ == "__main__":
    B, C, H, W = 2, 4, 16, 16  # small shapes consistent with VHNLayer(C, H, W)

    key = jax.random.PRNGKey(0)
    kx, kw = jax.random.split(key)
    x = jax.random.normal(kx, (B, C, H, W), jnp.float32)
    weights = init_vhn_weights(kw, C, H, W)

    # Exercise both code paths: single fused launch and the two-launch path.
    out_fused = jax.block_until_ready(vhn_forward(x, weights))
    out_twopass = jax.block_until_ready(vhn_forward(x, weights, force_two_pass=True))

    # Pure-JAX reference for correctness.
    x_min, x_max = jnp.min(x), jnp.max(x)
    w_min, w_max = jnp.min(weights), jnp.max(weights)
    ref = (
        jnp.maximum((x - x_min) / (x_max - x_min), 0.0)
        * jnp.maximum((weights - w_min + 1.0) / (w_max - w_min + 2.0), 0.0)[None]
    )
    assert out_fused.shape == (B, C, H, W)
    assert jnp.allclose(out_fused, ref, atol=1e-5, rtol=1e-5)
    assert jnp.allclose(out_twopass, ref, atol=1e-5, rtol=1e-5)

    print("KERNEL_OK")
</pallas_src>

<mosaic_0001>
module attributes {stable_mosaic.version = 11 : i64} {
  func.func @_vhn_fused_kernel(%arg0: i32, %arg1: memref<2x8x128xf32, #tpu.memory_space<vmem>>, %arg2: memref<1x8x128xf32, #tpu.memory_space<vmem>>, %arg3: memref<2x8x128xf32, #tpu.memory_space<vmem>>) attributes {dimension_semantics = [#tpu.dimension_semantics<arbitrary>], iteration_bounds = array<i64: 1>, scalar_prefetch = 0 : i64, scratch_operands = 0 : i64, tpu.core_type = #tpu.core_type<tc>, window_params = [{pipeline_mode = #tpu.pipeline_mode<synchronous>, transform_indices = @transform_0, window_bounds = array<i64: 2, 8, 128>}, {pipeline_mode = #tpu.pipeline_mode<synchronous>, transform_indices = @transform_1, window_bounds = array<i64: 1, 8, 128>}, {pipeline_mode = #tpu.pipeline_mode<synchronous>, transform_indices = @transform_2, window_bounds = array<i64: 2, 8, 128>}]} {
    %c0 = arith.constant 0 : index
    %c0_0 = arith.constant 0 : index
    %c0_1 = arith.constant 0 : index
    %0 = vector.load %arg1[%c0, %c0_0, %c0_1] : memref<2x8x128xf32, #tpu.memory_space<vmem>>, vector<2x8x128xf32>
    %c0_2 = arith.constant 0 : index
    %c0_3 = arith.constant 0 : index
    %c0_4 = arith.constant 0 : index
    %1 = vector.load %arg2[%c0_2, %c0_3, %c0_4] : memref<1x8x128xf32, #tpu.memory_space<vmem>>, vector<1x8x128xf32>
    %2 = vector.shape_cast %0 : vector<2x8x128xf32> to vector<1x2x8x128xf32>
    %cst = arith.constant dense<0x7F800000> : vector<1xf32>
    %3 = vector.multi_reduction <minimumf>, %2, %cst [1, 2, 3] : vector<1x2x8x128xf32> to vector<1xf32>
    %4 = vector.shape_cast %3 : vector<1xf32> to vector<1x1x1x1xf32>
    %5 = vector.extract %4[0, 0, 0, 0] : f32 from vector<1x1x1x1xf32>
    %6 = vector.shape_cast %0 : vector<2x8x128xf32> to vector<1x2x8x128xf32>
    %cst_5 = arith.constant dense<0xFF800000> : vector<1xf32>
    %7 = vector.multi_reduction <maximumf>, %6, %cst_5 [1, 2, 3] : vector<1x2x8x128xf32> to vector<1xf32>
    %8 = vector.shape_cast %7 : vector<1xf32> to vector<1x1x1x1xf32>
    %9 = vector.extract %8[0, 0, 0, 0] : f32 from vector<1x1x1x1xf32>
    %10 = vector.shape_cast %1 : vector<1x8x128xf32> to vector<1x1x8x128xf32>
    %cst_6 = arith.constant dense<0x7F800000> : vector<1xf32>
    %11 = vector.multi_reduction <minimumf>, %10, %cst_6 [1, 2, 3] : vector<1x1x8x128xf32> to vector<1xf32>
    %12 = vector.shape_cast %11 : vector<1xf32> to vector<1x1x1x1xf32>
    %13 = vector.extract %12[0, 0, 0, 0] : f32 from vector<1x1x1x1xf32>
    %14 = vector.shape_cast %1 : vector<1x8x128xf32> to vector<1x1x8x128xf32>
    %cst_7 = arith.constant dense<0xFF800000> : vector<1xf32>
    %15 = vector.multi_reduction <maximumf>, %14, %cst_7 [1, 2, 3] : vector<1x1x8x128xf32> to vector<1xf32>
    %16 = vector.shape_cast %15 : vector<1xf32> to vector<1x1x1x1xf32>
    %17 = vector.extract %16[0, 0, 0, 0] : f32 from vector<1x1x1x1xf32>
    %18 = vector.broadcast %5 : f32 to vector<2x8x128xf32>
    %19 = arith.subf %0, %18 : vector<2x8x128xf32>
    %20 = arith.subf %9, %5 : f32
    %cst_8 = arith.constant 1.000000e+00 : f32
    %21 = arith.divf %cst_8, %20 : f32
    %22 = vector.broadcast %21 : f32 to vector<2x8x128xf32>
    %23 = arith.mulf %19, %22 : vector<2x8x128xf32>
    %cst_9 = arith.constant 0.000000e+00 : f32
    %24 = vector.broadcast %cst_9 : f32 to vector<2x8x128xf32>
    %25 = arith.maximumf %23, %24 : vector<2x8x128xf32>
    %26 = vector.broadcast %13 : f32 to vector<1x8x128xf32>
    %27 = arith.subf %1, %26 : vector<1x8x128xf32>
    %cst_10 = arith.constant 1.000000e+00 : f32
    %28 = vector.broadcast %cst_10 : f32 to vector<1x8x128xf32>
    %29 = arith.addf %27, %28 : vector<1x8x128xf32>
    %30 = arith.subf %17, %13 : f32
    %cst_11 = arith.constant 2.000000e+00 : f32
    %31 = arith.addf %30, %cst_11 : f32
    %cst_12 = arith.constant 1.000000e+00 : f32
    %32 = arith.divf %cst_12, %31 : f32
    %33 = vector.broadcast %32 : f32 to vector<1x8x128xf32>
    %34 = arith.mulf %29, %33 : vector<1x8x128xf32>
    %cst_13 = arith.constant 0.000000e+00 : f32
    %35 = vector.broadcast %cst_13 : f32 to vector<1x8x128xf32>
    %36 = arith.maximumf %34, %35 : vector<1x8x128xf32>
    %37 = vector.broadcast %36 : vector<1x8x128xf32> to vector<2x8x128xf32>
    %38 = arith.mulf %25, %37 : vector<2x8x128xf32>
    %c0_14 = arith.constant 0 : index
    %c0_15 = arith.constant 0 : index
    %c0_16 = arith.constant 0 : index
    %39 = vector.load %arg3[%c0_14, %c0_15, %c0_16] : memref<2x8x128xf32, #tpu.memory_space<vmem>>, vector<2x8x128xf32>
    tpu.vector_store %arg3[%c0_14, %c0_15, %c0_16], %38 {strides = array<i32>} : memref<2x8x128xf32, #tpu.memory_space<vmem>>, vector<2x8x128xf32>,
    return
  }
  func.func @transform_0(%arg0: i32) -> (i32, i32, i32) {
    %c0_i32 = arith.constant 0 : i32
    %c0_i32_0 = arith.constant 0 : i32
    %c0_i32_1 = arith.constant 0 : i32
    %c0_i32_2 = arith.constant 0 : i32
    return %c0_i32, %c0_i32_0, %c0_i32_1 : i32, i32, i32
  }
  func.func @transform_1(%arg0: i32) -> (i32, i32, i32) {
    %c0_i32 = arith.constant 0 : i32
    %c0_i32_0 = arith.constant 0 : i32
    %c0_i32_1 = arith.constant 0 : i32
    %c0_i32_2 = arith.constant 0 : i32
    return %c0_i32, %c0_i32_0, %c0_i32_1 : i32, i32, i32
  }
  func.func @transform_2(%arg0: i32) -> (i32, i32, i32) {
    %c0_i32 = arith.constant 0 : i32
    %c0_i32_0 = arith.constant 0 : i32
    %c0_i32_1 = arith.constant 0 : i32
    %c0_i32_2 = arith.constant 0 : i32
    return %c0_i32, %c0_i32_0, %c0_i32_1 : i32, i32, i32
  }
}

</mosaic_0001>

<llo_original>
// kernel: vhn_forward.1
$region0: #{vhn_forward.1}
  #allocation0 [shape = 'u32[]', space=smem, size = 0x4, offset = 0x4, fixed_abs, tag = 'smem constant byte address 0x4 - core index']
  #allocation1 [shape = 'u32[144,128]{1,0:T(1,128)}', space=vmem, size = 0x12000, scoped, tag = 'internal scratch']
  %s0 = inlined_call_operand.vmem [shape: f32[2,8,128], index: 0, kind: input, shape index: {}]
  %s1 = inlined_call_operand.vmem [shape: f32[1,8,128], index: 1, kind: input, shape index: {}]
  %s2 = inlined_call_operand.vmem [shape: f32[2,8,128], index: 2, kind: output, shape index: {}]
  %s3 = sld [smem:[#allocation0]]
  $region18: #{vhn_forward.1} parent=0
    _
  %s5 = ssub.s32 1, %s3
  %s6 = scalar_select 0, %s5, %s3
  // Predicated region
  $region2: #{vhn_forward.1} parent=0 // pred_check
    _
  $region3: #{vhn_forward.1} parent=0 // pred_check_branch
    %8 = sbr.rel (0) target = $region5
  $region4: #{vhn_forward.1} parent=0 // pred_region
    _
  $region5: #{vhn_forward.1} parent=0 // pred_fallthru
    _
  // Predicated region
  $region6: #{vhn_forward.1} parent=0 // pred_check
    _
  $region7: #{vhn_forward.1} parent=0 // pred_check_branch
    %10 = sbr.rel (0) target = $region9
  $region8: #{vhn_forward.1} parent=0 // pred_region
    _
  $region9: #{vhn_forward.1} parent=0 // pred_fallthru
    _
  %v11 = vld [vmem:[%s0] sm:$0xff]
  %v12 = vld [vmem:[%s0 + $0x8] sm:$0xff]
  %v13 = vld [vmem:[%s1] sm:$0xff]
  %v14 = vmin.f32 %v11, %v12
  %15 = vmin.xlane.f32.xlu0 %v14
  %v16 = vpop.xlane.xlu0 %15
  %v17 = vrot.slane %v16, 4
  %v18 = vmin.f32 %v16, %v17
  %v19 = vrot.slane %v18, 2
  %v20 = vmin.f32 %v18, %v19
  %v21 = vrot.slane %v20, 1
  %v22 = vmin.f32 %v20, %v21
  %s23 = vtos %v22
  %v24 = vmax.f32 %v11, %v12
  %25 = vmax.xlane.f32.xlu0 %v24
  %v26 = vpop.xlane.xlu0 %25
  %v27 = vrot.slane %v26, 4
  %v28 = vmax.f32 %v26, %v27
  %v29 = vrot.slane %v28, 2
  %v30 = vmax.f32 %v28, %v29
  %v31 = vrot.slane %v30, 1
  %v32 = vmax.f32 %v30, %v31
  %s33 = vtos %v32
  %34 = vmin.xlane.f32.xlu0 %v13
  %v35 = vpop.xlane.xlu0 %34
  %v36 = vrot.slane %v35, 4
  %v37 = vmin.f32 %v35, %v36
  %v38 = vrot.slane %v37, 2
  %v39 = vmin.f32 %v37, %v38
  %v40 = vrot.slane %v39, 1
  %v41 = vmin.f32 %v39, %v40
  %s42 = vtos %v41
  %43 = vmax.xlane.f32.xlu0 %v13
  %v44 = vpop.xlane.xlu0 %43
  %v45 = vrot.slane %v44, 4
  %v46 = vmax.f32 %v44, %v45
  %v47 = vrot.slane %v46, 2
  %v48 = vmax.f32 %v46, %v47
  %v49 = vrot.slane %v48, 1
  %v50 = vmax.f32 %v48, %v49
  %s51 = vtos %v50
  %v52 = vstv %s23
  %v53 = vsub.f32 %v11, %v52
  %v54 = vsub.f32 %v12, %v52
  %s55 = ssub.f32 %s33, %s23
  %v56 = vstv %s55
  %v57 = vrcp.pop %v56
  %s58 = vtos %v57
  %v59 = vstv %s58
  %v60 = vmul.f32 %v53, %v59
  %v61 = vmul.f32 %v54, %v59
  %v62 = vmax.f32 %v60, 0.0
  %v63 = vmax.f32 %v61, 0.0
  %v64 = vstv %s42
  %v65 = vsub.f32 %v13, %v64
  %v66 = vadd.f32 %v65, 1.0
  %s67 = ssub.f32 %s51, %s42
  %s68 = sadd.f32 %s67, 2.0
  %v69 = vstv %s68
  %v70 = vrcp.pop %v69
  %s71 = vtos %v70
  %v72 = vstv %s71
  %v73 = vmul.f32 %v66, %v72
  %v74 = vmax.f32 %v73, 0.0
  %v75 = vmul.f32 %v62, %v74
  %v76 = vmul.f32 %v63, %v74
  %77 = vst [vmem:[%s2] sm:$0xff] %v75
  %78 = vst [vmem:[%s2 + $0x8] sm:$0xff] %v76
  // Predicated region
  $region10: #{vhn_forward.1} parent=0 // pred_check
    _
  $region11: #{vhn_forward.1} parent=0 // pred_check_branch
    %80 = sbr.rel (0) target = $region13
  $region12: #{vhn_forward.1} parent=0 // pred_region
    _
  $region13: #{vhn_forward.1} parent=0 // pred_fallthru
    _
  // Predicated region
  $region14: #{vhn_forward.1} parent=0 // pred_check
    _
  $region15: #{vhn_forward.1} parent=0 // pred_check_branch
    %82 = sbr.rel (0) target = $region17
  $region16: #{vhn_forward.1} parent=0 // pred_region
    _
  $region17: #{vhn_forward.1} parent=0 // pred_fallthru
    _

</llo_original>
